<compile_context>
chip_gen: v6e
topology: v6e:2x2x1
jax: 0.10.0
libtpu: 0.0.40
codegen_flags: <defaults>
</compile_context>

<pallas_src>
import functools

import jax
import jax.numpy as jnp
from jax.experimental import pallas as pl
from jax.experimental.pallas import tpu as pltpu


def _round_up(x, m):
    return ((x + m - 1) // m) * m


def _round_down(x, m):
    return (x // m) * m


def _spec(block_shape, index_map, buffer_count=None):
    """BlockSpec helper; applies pipeline_mode when requested/supported."""
    if buffer_count is None:
        return pl.BlockSpec(block_shape, index_map)
    try:
        return pl.BlockSpec(block_shape, index_map,
                            pipeline_mode=pl.Buffered(buffer_count))
    except (TypeError, AttributeError):
        # Older API without pipeline_mode: fall back to default buffering.
        return pl.BlockSpec(block_shape, index_map)


def _vmem_limit_bytes():
    """Generation-aware VMEM cap: ~112 MiB on 128 MiB parts, ~52 MiB on v7x."""
    try:
        cap = int(pltpu.get_tpu_info().vmem_capacity_bytes)
    except Exception:
        cap = 64 * 1024 * 1024
    return max(32 * 1024 * 1024, min(cap * 7 // 8, cap - 12 * 1024 * 1024))


def _gated_combination_kernel(
    frozen_ref, finetuned_ref,
    wf_ref, bf_ref, wi_ref, bi_ref, wo_ref, bo_ref,
    out_ref, *, num_subtiles,
):
    # Native-dtype weights straight into the MXU (bf16 weights are not
    # upcast); f32 accumulation via preferred_element_type.
    wf = wf_ref[...]
    wi = wi_ref[...]
    wo = wo_ref[...]
    bf = bf_ref[...].astype(jnp.float32)
    bi = bi_ref[...].astype(jnp.float32)
    bo = bo_ref[...].astype(jnp.float32)

    tb = frozen_ref.shape[0]
    rows = tb // num_subtiles

    # Static sub-tile loop: sub-tile s's (combined @ Wo) matmul is independent
    # of sub-tile s+1's Wf/Wi matmuls, giving the scheduler MXU work to
    # overlap with the other sub-tile's sigmoid/tanh (EUP) and gating (VPU).
    for s in range(num_subtiles):
        lo = s * rows
        hi = tb if s == num_subtiles - 1 else lo + rows

        xf = frozen_ref[lo:hi, :]
        xt = finetuned_ref[lo:hi, :]

        forget_gate = jax.nn.sigmoid(
            jnp.dot(xf, wf, preferred_element_type=jnp.float32) + bf)
        input_gate = jax.nn.sigmoid(
            jnp.dot(xt, wi, preferred_element_type=jnp.float32) + bi)

        # Elementwise gate math in f32 (cheap; matches the torch reference).
        combined = (forget_gate * xf.astype(jnp.float32)
                    + input_gate * xt.astype(jnp.float32))

        output_gate = jax.nn.sigmoid(
            jnp.dot(combined.astype(wo.dtype), wo,
                    preferred_element_type=jnp.float32) + bo)

        out_ref[lo:hi, :] = (
            output_gate * jnp.tanh(combined)).astype(out_ref.dtype)


@functools.partial(jax.jit, static_argnames=("block_b",))
def gated_combination(
    frozen, finetuned,
    w_forget, b_forget, w_input, b_input, w_output, b_output,
    *, block_b=1024,
):
    """Pallas TPU implementation of GatedCombination.forward.

    frozen, finetuned: [B, E]; weights: [E, E] ([in, out]); biases: [E].
    """
    B, E = frozen.shape
    assert finetuned.shape == (B, E)

    abytes = frozen.dtype.itemsize
    wbytes = w_forget.dtype.itemsize

    vmem_limit = _vmem_limit_bytes()

    # Resident (single-buffered) weights + padded bias blocks.
    resident = 3 * E * E * wbytes + 3 * 8 * _round_up(E, 128) * wbytes
    # TODO(synk): if the three ExE weights alone exceed the VMEM budget (very
    # large E), add a weight-tiling grid axis / pl.ANY + emit_pipeline fallback.

    # Sublane packing of the activation dtype: 8 rows f32, 16 bf16, 32 int8.
    pack = max(8, 32 // abytes)

    # Per-row VMEM: pipelined IO (2 inputs + 1 output, assume up to 3 buffers)
    # plus f32 elementwise intermediates (~10 E-wide f32 temporaries).
    per_row = 3 * 3 * E * abytes + 10 * E * 4
    avail = vmem_limit - resident - (2 << 20)
    tb_budget = max(pack, avail // per_row)

    if B <= min(block_b, tb_budget):
        tb = B  # whole batch in one block; full-dim blocks are always legal
    else:
        tb = _round_down(min(block_b, tb_budget), pack)
        if tb >= 2 * pack:
            tb = _round_down(tb, 2 * pack)  # clean two-way sub-tile split
        tb = max(tb, pack)

    num_subtiles = 2 if (tb >= 2 * pack and tb % 2 == 0
                         and (tb // 2) % pack == 0) else 1

    steps = pl.cdiv(B, tb)
    # Deeper input pipelining only in the small-E, HBM-bound regime with a
    # long enough grid to benefit; otherwise keep the default double buffer.
    in_row_bufs = 3 if (E <= 256 and steps >= 4) else None

    b_f = b_forget.reshape(1, E)
    b_i = b_input.reshape(1, E)
    b_o = b_output.reshape(1, E)

    in_row_spec = _spec((tb, E), lambda i: (i, 0), buffer_count=in_row_bufs)
    out_row_spec = pl.BlockSpec((tb, E), lambda i: (i, 0))
    weight_spec = _spec((E, E), lambda i: (0, 0), buffer_count=1)  # resident
    bias_spec = _spec((1, E), lambda i: (0, 0), buffer_count=1)    # resident

    cost = pl.CostEstimate(
        flops=6 * B * E * E,
        transcendentals=4 * B * E,
        bytes_accessed=3 * B * E * abytes + 3 * E * (E + 1) * wbytes,
    )

    kernel = functools.partial(_gated_combination_kernel,
                               num_subtiles=num_subtiles)

    return pl.pallas_call(
        kernel,
        out_shape=jax.ShapeDtypeStruct((B, E), frozen.dtype),
        grid=(steps,),
        in_specs=[
            in_row_spec, in_row_spec,
            weight_spec, bias_spec,
            weight_spec, bias_spec,
            weight_spec, bias_spec,
        ],
        out_specs=out_row_spec,
        compiler_params=pltpu.CompilerParams(
            dimension_semantics=("parallel",),
            vmem_limit_bytes=vmem_limit,
        ),
        cost_estimate=cost,
    )(frozen, finetuned, w_forget, b_f, w_input, b_i, w_output, b_o)


def _reference(frozen, finetuned, wf, bf, wi, bi, wo, bo):
    forget_gate = jax.nn.sigmoid(frozen @ wf + bf)
    input_gate = jax.nn.sigmoid(finetuned @ wi + bi)
    combined = forget_gate * frozen + input_gate * finetuned
    output_gate = jax.nn.sigmoid(combined @ wo + bo)
    return output_gate * jnp.tanh(combined)


if __name__ == "__main__":
    B, E = 32, 128  # small batch, embedding_dim
    key = jax.random.PRNGKey(0)
    keys = jax.random.split(key, 8)

    frozen = jax.random.normal(keys[0], (B, E), dtype=jnp.float32)
    finetuned = jax.random.normal(keys[1], (B, E), dtype=jnp.float32)

    scale = 1.0 / (E ** 0.5)
    w_f = jax.random.normal(keys[2], (E, E), dtype=jnp.float32) * scale
    b_f = jax.random.normal(keys[3], (E,), dtype=jnp.float32) * 0.1
    w_i = jax.random.normal(keys[4], (E, E), dtype=jnp.float32) * scale
    b_i = jax.random.normal(keys[5], (E,), dtype=jnp.float32) * 0.1
    w_o = jax.random.normal(keys[6], (E, E), dtype=jnp.float32) * scale
    b_o = jax.random.normal(keys[7], (E,), dtype=jnp.float32) * 0.1

    ref = _reference(frozen, finetuned, w_f, b_f, w_i, b_i, w_o, b_o)

    # Path 1: single block covering the whole batch (2-way in-kernel subtiles).
    out1 = gated_combination(frozen, finetuned, w_f, b_f, w_i, b_i, w_o, b_o)
    out1 = jax.block_until_ready(out1)
    assert out1.shape == (B, E), out1.shape
    assert jnp.allclose(out1, ref, rtol=1e-3, atol=1e-3), (
        float(jnp.max(jnp.abs(out1 - ref))))

    # Path 2: small block_b forces a multi-step pipelined grid (4 steps).
    out2 = gated_combination(frozen, finetuned, w_f, b_f, w_i, b_i, w_o, b_o,
                             block_b=8)
    out2 = jax.block_until_ready(out2)
    assert out2.shape == (B, E), out2.shape
    assert jnp.allclose(out2, ref, rtol=1e-3, atol=1e-3), (
        float(jnp.max(jnp.abs(out2 - ref))))

    print("KERNEL_OK")
</pallas_src>

<mosaic_0001>
module attributes {stable_mosaic.version = 11 : i64} {
  func.func @_gated_combination_kernel(%arg0: i32, %arg1: memref<32x128xf32, #tpu.memory_space<vmem>>, %arg2: memref<32x128xf32, #tpu.memory_space<vmem>>, %arg3: memref<128x128xf32, #tpu.memory_space<vmem>>, %arg4: memref<1x128xf32, #tpu.memory_space<vmem>>, %arg5: memref<128x128xf32, #tpu.memory_space<vmem>>, %arg6: memref<1x128xf32, #tpu.memory_space<vmem>>, %arg7: memref<128x128xf32, #tpu.memory_space<vmem>>, %arg8: memref<1x128xf32, #tpu.memory_space<vmem>>, %arg9: memref<32x128xf32, #tpu.memory_space<vmem>>) attributes {dimension_semantics = [#tpu.dimension_semantics<parallel>], iteration_bounds = array<i64: 1>, scalar_prefetch = 0 : i64, scratch_operands = 0 : i64, tpu.core_type = #tpu.core_type<tc>, window_params = [{transform_indices = @transform_0, window_bounds = array<i64: 32, 128>}, {transform_indices = @transform_1, window_bounds = array<i64: 32, 128>}, {pipeline_mode = #tpu.pipeline_mode<synchronous>, transform_indices = @transform_2, window_bounds = array<i64: 128, 128>}, {pipeline_mode = #tpu.pipeline_mode<synchronous>, transform_indices = @transform_3, window_bounds = array<i64: 1, 128>}, {pipeline_mode = #tpu.pipeline_mode<synchronous>, transform_indices = @transform_4, window_bounds = array<i64: 128, 128>}, {pipeline_mode = #tpu.pipeline_mode<synchronous>, transform_indices = @transform_5, window_bounds = array<i64: 1, 128>}, {pipeline_mode = #tpu.pipeline_mode<synchronous>, transform_indices = @transform_6, window_bounds = array<i64: 128, 128>}, {pipeline_mode = #tpu.pipeline_mode<synchronous>, transform_indices = @transform_7, window_bounds = array<i64: 1, 128>}, {transform_indices = @transform_8, window_bounds = array<i64: 32, 128>}]} {
    %c0 = arith.constant 0 : index
    %c0_0 = arith.constant 0 : index
    %0 = vector.load %arg3[%c0, %c0_0] : memref<128x128xf32, #tpu.memory_space<vmem>>, vector<128x128xf32>
    %c0_1 = arith.constant 0 : index
    %c0_2 = arith.constant 0 : index
    %1 = vector.load %arg5[%c0_1, %c0_2] : memref<128x128xf32, #tpu.memory_space<vmem>>, vector<128x128xf32>
    %c0_3 = arith.constant 0 : index
    %c0_4 = arith.constant 0 : index
    %2 = vector.load %arg7[%c0_3, %c0_4] : memref<128x128xf32, #tpu.memory_space<vmem>>, vector<128x128xf32>
    %c0_5 = arith.constant 0 : index
    %c0_6 = arith.constant 0 : index
    %3 = vector.load %arg4[%c0_5, %c0_6] : memref<1x128xf32, #tpu.memory_space<vmem>>, vector<1x128xf32>
    %c0_7 = arith.constant 0 : index
    %c0_8 = arith.constant 0 : index
    %4 = vector.load %arg6[%c0_7, %c0_8] : memref<1x128xf32, #tpu.memory_space<vmem>>, vector<1x128xf32>
    %c0_9 = arith.constant 0 : index
    %c0_10 = arith.constant 0 : index
    %5 = vector.load %arg8[%c0_9, %c0_10] : memref<1x128xf32, #tpu.memory_space<vmem>>, vector<1x128xf32>
    %c0_11 = arith.constant 0 : index
    %c0_12 = arith.constant 0 : index
    %6 = vector.load %arg1[%c0_11, %c0_12] : memref<32x128xf32, #tpu.memory_space<vmem>>, vector<16x128xf32>
    %c0_13 = arith.constant 0 : index
    %c0_14 = arith.constant 0 : index
    %7 = vector.load %arg2[%c0_13, %c0_14] : memref<32x128xf32, #tpu.memory_space<vmem>>, vector<16x128xf32>
    %cst = arith.constant dense<0.000000e+00> : vector<16x128xf32>
    %8 = tpu.matmul %6, %0, %cst {dimension_numbers = #tpu.dot_dimension_numbers<[1], [0], [0], [1], [0, 0, 1, 1], [], []>} : vector<16x128xf32>, vector<128x128xf32>, vector<16x128xf32> -> vector<16x128xf32>
    %9 = vector.broadcast %3 : vector<1x128xf32> to vector<16x128xf32>
    %10 = arith.addf %8, %9 : vector<16x128xf32>
    %11 = arith.negf %10 : vector<16x128xf32>
    %12 = math.exp %11 : vector<16x128xf32>
    %cst_15 = arith.constant 1.000000e+00 : f32
    %13 = vector.broadcast %cst_15 : f32 to vector<16x128xf32>
    %14 = arith.addf %13, %12 : vector<16x128xf32>
    %15 = arith.divf %13, %14 : vector<16x128xf32>
    %cst_16 = arith.constant dense<0.000000e+00> : vector<16x128xf32>
    %16 = tpu.matmul %7, %1, %cst_16 {dimension_numbers = #tpu.dot_dimension_numbers<[1], [0], [0], [1], [0, 0, 1, 1], [], []>} : vector<16x128xf32>, vector<128x128xf32>, vector<16x128xf32> -> vector<16x128xf32>
    %17 = vector.broadcast %4 : vector<1x128xf32> to vector<16x128xf32>
    %18 = arith.addf %16, %17 : vector<16x128xf32>
    %19 = arith.negf %18 : vector<16x128xf32>
    %20 = math.exp %19 : vector<16x128xf32>
    %cst_17 = arith.constant 1.000000e+00 : f32
    %21 = vector.broadcast %cst_17 : f32 to vector<16x128xf32>
    %22 = arith.addf %21, %20 : vector<16x128xf32>
    %23 = arith.divf %21, %22 : vector<16x128xf32>
    %24 = arith.mulf %15, %6 : vector<16x128xf32>
    %25 = arith.mulf %23, %7 : vector<16x128xf32>
    %26 = arith.addf %24, %25 : vector<16x128xf32>
    %cst_18 = arith.constant dense<0.000000e+00> : vector<16x128xf32>
    %27 = tpu.matmul %26, %2, %cst_18 {dimension_numbers = #tpu.dot_dimension_numbers<[1], [0], [0], [1], [0, 0, 1, 1], [], []>} : vector<16x128xf32>, vector<128x128xf32>, vector<16x128xf32> -> vector<16x128xf32>
    %28 = vector.broadcast %5 : vector<1x128xf32> to vector<16x128xf32>
    %29 = arith.addf %27, %28 : vector<16x128xf32>
    %30 = arith.negf %29 : vector<16x128xf32>
    %31 = math.exp %30 : vector<16x128xf32>
    %cst_19 = arith.constant 1.000000e+00 : f32
    %32 = vector.broadcast %cst_19 : f32 to vector<16x128xf32>
    %33 = arith.addf %32, %31 : vector<16x128xf32>
    %34 = arith.divf %32, %33 : vector<16x128xf32>
    %35 = math.tanh %26 : vector<16x128xf32>
    %36 = arith.mulf %34, %35 : vector<16x128xf32>
    %c0_20 = arith.constant 0 : index
    %c0_21 = arith.constant 0 : index
    %37 = vector.load %arg9[%c0_20, %c0_21] : memref<32x128xf32, #tpu.memory_space<vmem>>, vector<16x128xf32>
    tpu.vector_store %arg9[%c0_20, %c0_21], %36 {strides = array<i32>} : memref<32x128xf32, #tpu.memory_space<vmem>>, vector<16x128xf32>,
    %c16 = arith.constant 16 : index
    %c0_22 = arith.constant 0 : index
    %38 = vector.load %arg1[%c16, %c0_22] : memref<32x128xf32, #tpu.memory_space<vmem>>, vector<16x128xf32>
    %c16_23 = arith.constant 16 : index
    %c0_24 = arith.constant 0 : index
    %39 = vector.load %arg2[%c16_23, %c0_24] : memref<32x128xf32, #tpu.memory_space<vmem>>, vector<16x128xf32>
    %cst_25 = arith.constant dense<0.000000e+00> : vector<16x128xf32>
    %40 = tpu.matmul %38, %0, %cst_25 {dimension_numbers = #tpu.dot_dimension_numbers<[1], [0], [0], [1], [0, 0, 1, 1], [], []>} : vector<16x128xf32>, vector<128x128xf32>, vector<16x128xf32> -> vector<16x128xf32>
    %41 = vector.broadcast %3 : vector<1x128xf32> to vector<16x128xf32>
    %42 = arith.addf %40, %41 : vector<16x128xf32>
    %43 = arith.negf %42 : vector<16x128xf32>
    %44 = math.exp %43 : vector<16x128xf32>
    %cst_26 = arith.constant 1.000000e+00 : f32
    %45 = vector.broadcast %cst_26 : f32 to vector<16x128xf32>
    %46 = arith.addf %45, %44 : vector<16x128xf32>
    %47 = arith.divf %45, %46 : vector<16x128xf32>
    %cst_27 = arith.constant dense<0.000000e+00> : vector<16x128xf32>
    %48 = tpu.matmul %39, %1, %cst_27 {dimension_numbers = #tpu.dot_dimension_numbers<[1], [0], [0], [1], [0, 0, 1, 1], [], []>} : vector<16x128xf32>, vector<128x128xf32>, vector<16x128xf32> -> vector<16x128xf32>
    %49 = vector.broadcast %4 : vector<1x128xf32> to vector<16x128xf32>
    %50 = arith.addf %48, %49 : vector<16x128xf32>
    %51 = arith.negf %50 : vector<16x128xf32>
    %52 = math.exp %51 : vector<16x128xf32>
    %cst_28 = arith.constant 1.000000e+00 : f32
    %53 = vector.broadcast %cst_28 : f32 to vector<16x128xf32>
    %54 = arith.addf %53, %52 : vector<16x128xf32>
    %55 = arith.divf %53, %54 : vector<16x128xf32>
    %56 = arith.mulf %47, %38 : vector<16x128xf32>
    %57 = arith.mulf %55, %39 : vector<16x128xf32>
    %58 = arith.addf %56, %57 : vector<16x128xf32>
    %cst_29 = arith.constant dense<0.000000e+00> : vector<16x128xf32>
    %59 = tpu.matmul %58, %2, %cst_29 {dimension_numbers = #tpu.dot_dimension_numbers<[1], [0], [0], [1], [0, 0, 1, 1], [], []>} : vector<16x128xf32>, vector<128x128xf32>, vector<16x128xf32> -> vector<16x128xf32>
    %60 = vector.broadcast %5 : vector<1x128xf32> to vector<16x128xf32>
    %61 = arith.addf %59, %60 : vector<16x128xf32>
    %62 = arith.negf %61 : vector<16x128xf32>
    %63 = math.exp %62 : vector<16x128xf32>
    %cst_30 = arith.constant 1.000000e+00 : f32
    %64 = vector.broadcast %cst_30 : f32 to vector<16x128xf32>
    %65 = arith.addf %64, %63 : vector<16x128xf32>
    %66 = arith.divf %64, %65 : vector<16x128xf32>
    %67 = math.tanh %58 : vector<16x128xf32>
    %68 = arith.mulf %66, %67 : vector<16x128xf32>
    %c16_31 = arith.constant 16 : index
    %c0_32 = arith.constant 0 : index
    %69 = vector.load %arg9[%c16_31, %c0_32] : memref<32x128xf32, #tpu.memory_space<vmem>>, vector<16x128xf32>
    tpu.vector_store %arg9[%c16_31, %c0_32], %68 {strides = array<i32>} : memref<32x128xf32, #tpu.memory_space<vmem>>, vector<16x128xf32>,
    return
  }
  func.func @transform_0(%arg0: i32) -> (i32, i32) {
    %c0_i32 = arith.constant 0 : i32
    %c0_i32_0 = arith.constant 0 : i32
    return %arg0, %c0_i32 : i32, i32
  }
  func.func @transform_1(%arg0: i32) -> (i32, i32) {
    %c0_i32 = arith.constant 0 : i32
    %c0_i32_0 = arith.constant 0 : i32
    return %arg0, %c0_i32 : i32, i32
  }
  func.func @transform_2(%arg0: i32) -> (i32, i32) {
    %c0_i32 = arith.constant 0 : i32
    %c0_i32_0 = arith.constant 0 : i32
    %c0_i32_1 = arith.constant 0 : i32
    return %c0_i32, %c0_i32_0 : i32, i32
  }
  func.func @transform_3(%arg0: i32) -> (i32, i32) {
    %c0_i32 = arith.constant 0 : i32
    %c0_i32_0 = arith.constant 0 : i32
    %c0_i32_1 = arith.constant 0 : i32
    return %c0_i32, %c0_i32_0 : i32, i32
  }
  func.func @transform_4(%arg0: i32) -> (i32, i32) {
    %c0_i32 = arith.constant 0 : i32
    %c0_i32_0 = arith.constant 0 : i32
    %c0_i32_1 = arith.constant 0 : i32
    return %c0_i32, %c0_i32_0 : i32, i32
  }
  func.func @transform_5(%arg0: i32) -> (i32, i32) {
    %c0_i32 = arith.constant 0 : i32
    %c0_i32_0 = arith.constant 0 : i32
    %c0_i32_1 = arith.constant 0 : i32
    return %c0_i32, %c0_i32_0 : i32, i32
  }
  func.func @transform_6(%arg0: i32) -> (i32, i32) {
    %c0_i32 = arith.constant 0 : i32
    %c0_i32_0 = arith.constant 0 : i32
    %c0_i32_1 = arith.constant 0 : i32
    return %c0_i32, %c0_i32_0 : i32, i32
  }
  func.func @transform_7(%arg0: i32) -> (i32, i32) {
    %c0_i32 = arith.constant 0 : i32
    %c0_i32_0 = arith.constant 0 : i32
    %c0_i32_1 = arith.constant 0 : i32
    return %c0_i32, %c0_i32_0 : i32, i32
  }
  func.func @transform_8(%arg0: i32) -> (i32, i32) {
    %c0_i32 = arith.constant 0 : i32
    %c0_i32_0 = arith.constant 0 : i32
    return %arg0, %c0_i32 : i32, i32
  }
}

</mosaic_0001>

<llo_original>
// kernel: gated_combination.1
$region0: #{gated_combination.1}
  #allocation0 [shape = 'u32[]', space=smem, size = 0x4, offset = 0x4, fixed_abs, tag = 'smem constant byte address 0x4 - core index']
  #allocation1 [shape = 'u32[144,128]{1,0:T(1,128)}', space=vmem, size = 0x12000, scoped, tag = 'internal scratch']
  %s0 = inlined_call_operand.hbm [shape: f32[32,128], index: 0, kind: input, shape index: {}]
  %s1 = inlined_call_operand.hbm [shape: f32[32,128], index: 1, kind: input, shape index: {}]
  %s2 = inlined_call_operand.hbm [shape: f32[128,128], index: 2, kind: input, shape index: {}]
  %s3 = inlined_call_operand.vmem [shape: f32[1,128], index: 3, kind: input, shape index: {}]
  %s4 = inlined_call_operand.hbm [shape: f32[128,128], index: 4, kind: input, shape index: {}]
  %s5 = inlined_call_operand.vmem [shape: f32[1,128], index: 5, kind: input, shape index: {}]
  %s6 = inlined_call_operand.hbm [shape: f32[128,128], index: 6, kind: input, shape index: {}]
  %s7 = inlined_call_operand.vmem [shape: f32[1,128], index: 7, kind: input, shape index: {}]
  %s8 = inlined_call_operand.hbm [shape: f32[32,128], index: 8, kind: output, shape index: {}]
  %s9 = sld [smem:[#allocation0]]
  $region62: #{gated_combination.1} parent=0
    _
  %s11 = ssub.s32 1, %s9
  %s12 = scalar_select 0, %s11, %s9
  $region1: #{gated_combination.1} parent=0
    #allocation2 [shape = 'u8[16384]{0}', space=vmem, size = 0x4000, scoped, tag = 'input window, operand 0, single buffered']
    #allocation3 [shape = 's32[1]{0}', space=sflag, size = 0x4, scoped, tag = 'scoped memory for gated_combination.1']
    #allocation4 [shape = 's32[1]{0}', space=sflag, size = 0x4, scoped, tag = 'scoped memory for gated_combination.1']
    #allocation5 [shape = 'u8[16384]{0}', space=vmem, size = 0x4000, scoped, tag = 'input window, operand 1, single buffered']
    #allocation6 [shape = 's32[1]{0}', space=sflag, size = 0x4, scoped, tag = 'scoped memory for gated_combination.1']
    #allocation7 [shape = 'u8[65536]{0}', space=vmem, size = 0x10000, scoped, tag = 'input window, operand 2, single buffered']
    #allocation8 [shape = 'u8[65536]{0}', space=vmem, size = 0x10000, scoped, tag = 'input window, operand 4, single buffered']
    #allocation9 [shape = 's32[1]{0}', space=sflag, size = 0x4, scoped, tag = 'scoped memory for gated_combination.1']
    #allocation10 [shape = 'u8[65536]{0}', space=vmem, size = 0x10000, scoped, tag = 'input window, operand 6, single buffered']
    #allocation11 [shape = 'u8[16384]{0}', space=vmem, size = 0x4000, scoped, tag = 'output window, operand 0, single buffered']
    %13 = vsyncpa [#allocation3], 0
    %14 = vsyncpa [#allocation6], 0
    %15 = vsyncpa [#allocation9], 0
    %16 = vsyncpa [#allocation4], 0
    // Predicated region
    $region2: #{gated_combination.1} parent=1 // pred_check
      _
    $region3: #{gated_combination.1} parent=1 // pred_check_branch
      %18 = sbr.rel (0) target = $region5
    $region4: #{gated_combination.1} parent=1 // pred_region
      %s20 = ssub.s32 512, 512
      %21 = vsyncadd [#allocation3], %s20
      %s22 = sshll.u32 [#allocation2], 4
      %s23 = int_to_ptr.vmem [resolvable:$true] %s22
      %28 = dma.hbm_to_vmem [thread:$0]  %s0, 512, %s23, [#allocation3], 128, 128, 8
    $region5: #{gated_combination.1} parent=1 // pred_fallthru
      _
    // Predicated region
    $region6: #{gated_combination.1} parent=1 // pred_check
      _
    $region7: #{gated_combination.1} parent=1 // pred_check_branch
      %30 = sbr.rel (0) target = $region9
    $region8: #{gated_combination.1} parent=1 // pred_region
      %s32 = ssub.s32 512, 512
      %33 = vsyncadd [#allocation6], %s32
      %s34 = sshll.u32 [#allocation5], 4
      %s35 = int_to_ptr.vmem [resolvable:$true] %s34
      %40 = dma.hbm_to_vmem [thread:$0]  %s1, 512, %s35, [#allocation6], 128, 128, 8
    $region9: #{gated_combination.1} parent=1 // pred_fallthru
      _
    // Predicated region
    $region10: #{gated_combination.1} parent=1 // pred_check
      _
    $region11: #{gated_combination.1} parent=1 // pred_check_branch
      %42 = sbr.rel (0) target = $region13
    $region12: #{gated_combination.1} parent=1 // pred_region
      %s44 = ssub.s32 2048, 2048
      %45 = vsyncadd [#allocation6], %s44
      %s46 = sshll.u32 [#allocation7], 4
      %s47 = int_to_ptr.vmem [resolvable:$true] %s46
      %52 = dma.hbm_to_vmem [thread:$0]  %s2, 2048, %s47, [#allocation6], 128, 128, 8
    $region13: #{gated_combination.1} parent=1 // pred_fallthru
      _
    // Predicated region
    $region14: #{gated_combination.1} parent=1 // pred_check
      _
    $region15: #{gated_combination.1} parent=1 // pred_check_branch
      %54 = sbr.rel (0) target = $region17
    $region16: #{gated_combination.1} parent=1 // pred_region
      _
    $region17: #{gated_combination.1} parent=1 // pred_fallthru
      _
    // Predicated region
    $region18: #{gated_combination.1} parent=1 // pred_check
      _
    $region19: #{gated_combination.1} parent=1 // pred_check_branch
      %56 = sbr.rel (0) target = $region21
    $region20: #{gated_combination.1} parent=1 // pred_region
      %s58 = ssub.s32 2048, 2048
      %59 = vsyncadd [#allocation9], %s58
      %s60 = sshll.u32 [#allocation8], 4
      %s61 = int_to_ptr.vmem [resolvable:$true] %s60
      %66 = dma.hbm_to_vmem [thread:$0]  %s4, 2048, %s61, [#allocation9], 128, 128, 8
    $region21: #{gated_combination.1} parent=1 // pred_fallthru
      _
    // Predicated region
    $region22: #{gated_combination.1} parent=1 // pred_check
      _
    $region23: #{gated_combination.1} parent=1 // pred_check_branch
      %68 = sbr.rel (0) target = $region25
    $region24: #{gated_combination.1} parent=1 // pred_region
      _
    $region25: #{gated_combination.1} parent=1 // pred_fallthru
      _
    // Predicated region
    $region26: #{gated_combination.1} parent=1 // pred_check
      _
    $region27: #{gated_combination.1} parent=1 // pred_check_branch
      %70 = sbr.rel (0) target = $region29
    $region28: #{gated_combination.1} parent=1 // pred_region
      %s72 = ssub.s32 2048, 2048
      %73 = vsyncadd [#allocation9], %s72
      %s74 = sshll.u32 [#allocation10], 4
      %s75 = int_to_ptr.vmem [resolvable:$true] %s74
      %80 = dma.hbm_to_vmem [thread:$0]  %s6, 2048, %s75, [#allocation9], 128, 128, 8
    $region29: #{gated_combination.1} parent=1 // pred_fallthru
      _
    // Predicated region
    $region30: #{gated_combination.1} parent=1 // pred_check
      _
    $region31: #{gated_combination.1} parent=1 // pred_check_branch
      %82 = sbr.rel (0) target = $region33
    $region32: #{gated_combination.1} parent=1 // pred_region
      _
    $region33: #{gated_combination.1} parent=1 // pred_fallthru
      _
    // Predicated region
    $region34: #{gated_combination.1} parent=1 // pred_check
      _
    $region35: #{gated_combination.1} parent=1 // pred_check_branch
      %84 = sbr.rel (0) target = $region37
    $region36: #{gated_combination.1} parent=1 // pred_region
      %85 = dma.done [#allocation3], 512
    $region37: #{gated_combination.1} parent=1 // pred_fallthru
      _
    // Predicated region
    $region38: #{gated_combination.1} parent=1 // pred_check
      _
    $region39: #{gated_combination.1} parent=1 // pred_check_branch
      %87 = sbr.rel (0) target = $region41
    $region40: #{gated_combination.1} parent=1 // pred_region
      %88 = dma.done [#allocation6], 512
    $region41: #{gated_combination.1} parent=1 // pred_fallthru
      _
    // Predicated region
    $region42: #{gated_combination.1} parent=1 // pred_check
      _
    $region43: #{gated_combination.1} parent=1 // pred_check_branch
      %90 = sbr.rel (0) target = $region45
    $region44: #{gated_combination.1} parent=1 // pred_region
      %91 = dma.done [#allocation6], 2048
    $region45: #{gated_combination.1} parent=1 // pred_fallthru
      _
    // Predicated region
    $region46: #{gated_combination.1} parent=1 // pred_check
      _
    $region47: #{gated_combination.1} parent=1 // pred_check_branch
      %93 = sbr.rel (0) target = $region49
    $region48: #{gated_combination.1} parent=1 // pred_region
      %94 = dma.done [#allocation9], 2048
    $region49: #{gated_combination.1} parent=1 // pred_fallthru
      _
    // Predicated region
    $region50: #{gated_combination.1} parent=1 // pred_check
      _
    $region51: #{gated_combination.1} parent=1 // pred_check_branch
      %96 = sbr.rel (0) target = $region53
    $region52: #{gated_combination.1} parent=1 // pred_region
      %97 = dma.done [#allocation9], 2048
    $region53: #{gated_combination.1} parent=1 // pred_fallthru
      _
    %v98 = vld [vmem:[#allocation7] sm:$0xff]
    %v99 = vld [vmem:[#allocation7 + $0x8] sm:$0xff]
    %v100 = vld [vmem:[#allocation7 + $0x10] sm:$0xff]
    %v101 = vld [vmem:[#allocation7 + $0x18] sm:$0xff]
    %v102 = vld [vmem:[#allocation7 + $0x20] sm:$0xff]
    %v103 = vld [vmem:[#allocation7 + $0x28] sm:$0xff]
    %v104 = vld [vmem:[#allocation7 + $0x30] sm:$0xff]
    %v105 = vld [vmem:[#allocation7 + $0x38] sm:$0xff]
    %v106 = vld [vmem:[#allocation7 + $0x40] sm:$0xff]
    %v107 = vld [vmem:[#allocation7 + $0x48] sm:$0xff]
    %v108 = vld [vmem:[#allocation7 + $0x50] sm:$0xff]
    %v109 = vld [vmem:[#allocation7 + $0x58] sm:$0xff]
    %v110 = vld [vmem:[#allocation7 + $0x60] sm:$0xff]
    %v111 = vld [vmem:[#allocation7 + $0x68] sm:$0xff]
    %v112 = vld [vmem:[#allocation7 + $0x70] sm:$0xff]
    %v113 = vld [vmem:[#allocation7 + $0x78] sm:$0xff]
    %v114 = vld [vmem:[#allocation8] sm:$0xff]
    %v115 = vld [vmem:[#allocation8 + $0x8] sm:$0xff]
    %v116 = vld [vmem:[#allocation8 + $0x10] sm:$0xff]
    %v117 = vld [vmem:[#allocation8 + $0x18] sm:$0xff]
    %v118 = vld [vmem:[#allocation8 + $0x20] sm:$0xff]
    %v119 = vld [vmem:[#allocation8 + $0x28] sm:$0xff]
    %v120 = vld [vmem:[#allocation8 + $0x30] sm:$0xff]
    %v121 = vld [vmem:[#allocation8 + $0x38] sm:$0xff]
    %v122 = vld [vmem:[#allocation8 + $0x40] sm:$0xff]
    %v123 = vld [vmem:[#allocation8 + $0x48] sm:$0xff]
    %v124 = vld [vmem:[#allocation8 + $0x50] sm:$0xff]
    %v125 = vld [vmem:[#allocation8 + $0x58] sm:$0xff]
    %v126 = vld [vmem:[#allocation8 + $0x60] sm:$0xff]
    %v127 = vld [vmem:[#allocation8 + $0x68] sm:$0xff]
    %v128 = vld [vmem:[#allocation8 + $0x70] sm:$0xff]
    %v129 = vld [vmem:[#allocation8 + $0x78] sm:$0xff]
    %v130 = vld [vmem:[#allocation10] sm:$0xff]
    %v131 = vld [vmem:[#allocation10 + $0x8] sm:$0xff]
    %v132 = vld [vmem:[#allocation10 + $0x10] sm:$0xff]
    %v133 = vld [vmem:[#allocation10 + $0x18] sm:$0xff]
    %v134 = vld [vmem:[#allocation10 + $0x20] sm:$0xff]
    %v135 = vld [vmem:[#allocation10 + $0x28] sm:$0xff]
    %v136 = vld [vmem:[#allocation10 + $0x30] sm:$0xff]
    %v137 = vld [vmem:[#allocation10 + $0x38] sm:$0xff]
    %v138 = vld [vmem:[#allocation10 + $0x40] sm:$0xff]
    %v139 = vld [vmem:[#allocation10 + $0x48] sm:$0xff]
    %v140 = vld [vmem:[#allocation10 + $0x50] sm:$0xff]
    %v141 = vld [vmem:[#allocation10 + $0x58] sm:$0xff]
    %v142 = vld [vmem:[#allocation10 + $0x60] sm:$0xff]
    %v143 = vld [vmem:[#allocation10 + $0x68] sm:$0xff]
    %v144 = vld [vmem:[#allocation10 + $0x70] sm:$0xff]
    %v145 = vld [vmem:[#allocation10 + $0x78] sm:$0xff]
    %v146 = vld [vmem:[%s3] sm:$0x1]
    %v147 = vld [vmem:[%s5] sm:$0x1]
    %v148 = vld [vmem:[%s7] sm:$0x1]
    %v149 = vld [vmem:[#allocation2] sm:$0xff]
    %v150 = vld [vmem:[#allocation2 + $0x8] sm:$0xff]
    %v151 = vld [vmem:[#allocation5] sm:$0xff]
    %v152 = vld [vmem:[#allocation5 + $0x8] sm:$0xff]
    %v154 = vlaneseq
    %v155 = vshrl.u32 %v154, 7
    %v156 = vsub.s32 0, %v155
    %v157 = vrot.slane %v146, %v156
    %159 = vmatprep.subr.mxu0 0.0
    %160 = vmatpush1.msra.mxu0 %v113
    %161 = vmatprep.subr.mxu0 0.0
    %162 = vmatpush1.msra.mxu0 %v112
    %163 = vmatprep.subr.mxu0 0.0
    %164 = vmatpush1.msra.mxu0 %v111
    %165 = vmatprep.subr.mxu0 0.0
    %166 = vmatpush1.msra.mxu0 %v110
    %167 = vmatprep.subr.mxu0 0.0
    %168 = vmatpush1.msra.mxu0 %v109
    %169 = vmatprep.subr.mxu0 0.0
    %170 = vmatpush1.msra.mxu0 %v108
    %171 = vmatprep.subr.mxu0 0.0
    %172 = vmatpush1.msra.mxu0 %v107
    %173 = vmatprep.subr.mxu0 0.0
    %174 = vmatpush1.msra.mxu0 %v106
    %175 = vmatprep.subr.mxu0 0.0
    %176 = vmatpush1.msra.mxu0 %v105
    %177 = vmatprep.subr.mxu0 0.0
    %178 = vmatpush1.msra.mxu0 %v104
    %179 = vmatprep.subr.mxu0 0.0
    %180 = vmatpush1.msra.mxu0 %v103
    %181 = vmatprep.subr.mxu0 0.0
    %182 = vmatpush1.msra.mxu0 %v102
    %183 = vmatprep.subr.mxu0 0.0
    %184 = vmatpush1.msra.mxu0 %v101
    %185 = vmatprep.subr.mxu0 0.0
    %186 = vmatpush1.msra.mxu0 %v100
    %187 = vmatprep.subr.mxu0 0.0
    %188 = vmatpush1.msra.mxu0 %v99
    %189 = vmatprep.subr.mxu0 0.0
    %190 = vmatpush1.msra.mxu0 %v98
    %191 = vmatprep.subr.mxu0 0.0
    %192 = vmatpush2.msra.mxu0 0.0
    %193 = vmatprep.subr.mxu0 0.0
    %194 = vmatpush2.msra.mxu0 0.0
    %195 = vmatprep.subr.mxu0 0.0
    %196 = vmatpush2.msra.mxu0 0.0
    %197 = vmatprep.subr.mxu0 0.0
    %198 = vmatpush2.msra.mxu0 0.0
    %199 = vmatprep.subr.mxu0 0.0
    %200 = vmatpush2.msra.mxu0 0.0
    %201 = vmatprep.subr.mxu0 0.0
    %202 = vmatpush2.msra.mxu0 0.0
    %203 = vmatprep.subr.mxu0 0.0
    %204 = vmatpush2.msra.mxu0 0.0
    %205 = vmatprep.subr.mxu0 0.0
    %206 = vmatpush2.msra.mxu0 0.0
    %207 = vmatprep.subr.mxu0 0.0
    %208 = vmatpush2.msra.mxu0 0.0
    %209 = vmatprep.subr.mxu0 0.0
    %210 = vmatpush2.msra.mxu0 0.0
    %211 = vmatprep.subr.mxu0 0.0
    %212 = vmatpush2.msra.mxu0 0.0
    %213 = vmatprep.subr.mxu0 0.0
    %214 = vmatpush2.msra.mxu0 0.0
    %215 = vmatprep.subr.mxu0 0.0
    %216 = vmatpush2.msra.mxu0 0.0
    %217 = vmatprep.subr.mxu0 0.0
    %218 = vmatpush2.msra.mxu0 0.0
    %219 = vmatprep.subr.mxu0 0.0
    %220 = vmatpush2.msra.mxu0 0.0
    %221 = vmatprep.subr.mxu0 0.0
    %222 = vmatpush2.msra.mxu0 0.0
    %223 = vmatprep.mubr.f32.mxu0 0.0
    %224 = vmatmul.mubr.f32.gmra.mxu0 %v149
    %v225 = vpop.f32.mrf.mxu0
    %v226 = vadd.f32 %v157, %v225
    %v227 = vpop.f32.mrf.mxu0
    %228 = vmatprep.mubr.f32.mxu0 0.0
    %229 = vmatmul.mubr.f32.gmra.mxu0 %v150
    %v230 = vpop.f32.mrf.mxu0
    %v231 = vadd.f32 %v157, %v230
    %v232 = vpop.f32.mrf.mxu0
    %233 = vdwg.mxu0
    %v234 = vxor.u32 %v226, 2147483648
    %v235 = vxor.u32 %v231, 2147483648
    %v236 = vmul.f32 %v234, 1.442695
    %v237 = vpow.pop %v236
    %v238 = vmul.f32 %v235, 1.442695
    %v239 = vpow.pop %v238
    %v240 = vadd.f32 %v237, 1.0
    %v241 = vadd.f32 %v239, 1.0
    %v242 = vrcp.pop %v240
    %v243 = vmul.f32 1.0, %v242
    %v244 = vrcp.pop %v241
    %v245 = vmul.f32 1.0, %v244
    %v247 = vlaneseq
    %v248 = vshrl.u32 %v247, 7
    %v249 = vsub.s32 0, %v248
    %v250 = vrot.slane %v147, %v249
    %252 = vmatprep.subr.mxu0 0.0
    %253 = vmatpush1.msra.mxu0 %v129
    %254 = vmatprep.subr.mxu0 0.0
    %255 = vmatpush1.msra.mxu0 %v128
    %256 = vmatprep.subr.mxu0 0.0
    %257 = vmatpush1.msra.mxu0 %v127
    %258 = vmatprep.subr.mxu0 0.0
    %259 = vmatpush1.msra.mxu0 %v126
    %260 = vmatprep.subr.mxu0 0.0
    %261 = vmatpush1.msra.mxu0 %v125
    %262 = vmatprep.subr.mxu0 0.0
    %263 = vmatpush1.msra.mxu0 %v124
    %264 = vmatprep.subr.mxu0 0.0
    %265 = vmatpush1.msra.mxu0 %v123
    %266 = vmatprep.subr.mxu0 0.0
    %267 = vmatpush1.msra.mxu0 %v122
    %268 = vmatprep.subr.mxu0 0.0
    %269 = vmatpush1.msra.mxu0 %v121
    %270 = vmatprep.subr.mxu0 0.0
    %271 = vmatpush1.msra.mxu0 %v120
    %272 = vmatprep.subr.mxu0 0.0
    %273 = vmatpush1.msra.mxu0 %v119
    %274 = vmatprep.subr.mxu0 0.0
    %275 = vmatpush1.msra.mxu0 %v118
    %276 = vmatprep.subr.mxu0 0.0
    %277 = vmatpush1.msra.mxu0 %v117
    %278 = vmatprep.subr.mxu0 0.0
    %279 = vmatpush1.msra.mxu0 %v116
    %280 = vmatprep.subr.mxu0 0.0
    %281 = vmatpush1.msra.mxu0 %v115
    %282 = vmatprep.subr.mxu0 0.0
    %283 = vmatpush1.msra.mxu0 %v114
    %284 = vmatprep.subr.mxu0 0.0
    %285 = vmatpush2.msra.mxu0 0.0
    %286 = vmatprep.subr.mxu0 0.0
    %287 = vmatpush2.msra.mxu0 0.0
    %288 = vmatprep.subr.mxu0 0.0
    %289 = vmatpush2.msra.mxu0 0.0
    %290 = vmatprep.subr.mxu0 0.0
    %291 = vmatpush2.msra.mxu0 0.0
    %292 = vmatprep.subr.mxu0 0.0
    %293 = vmatpush2.msra.mxu0 0.0
    %294 = vmatprep.subr.mxu0 0.0
    %295 = vmatpush2.msra.mxu0 0.0
    %296 = vmatprep.subr.mxu0 0.0
    %297 = vmatpush2.msra.mxu0 0.0
    %298 = vmatprep.subr.mxu0 0.0
    %299 = vmatpush2.msra.mxu0 0.0
    %300 = vmatprep.subr.mxu0 0.0
    %301 = vmatpush2.msra.mxu0 0.0
    %302 = vmatprep.subr.mxu0 0.0
    %303 = vmatpush2.msra.mxu0 0.0
    %304 = vmatprep.subr.mxu0 0.0
    %305 = vmatpush2.msra.mxu0 0.0
    %306 = vmatprep.subr.mxu0 0.0
    %307 = vmatpush2.msra.mxu0 0.0
    %308 = vmatprep.subr.mxu0 0.0
    %309 = vmatpush2.msra.mxu0 0.0
    %310 = vmatprep.subr.mxu0 0.0
    %311 = vmatpush2.msra.mxu0 0.0
    %312 = vmatprep.subr.mxu0 0.0
    %313 = vmatpush2.msra.mxu0 0.0
    %314 = vmatprep.subr.mxu0 0.0
    %315 = vmatpush2.msra.mxu0 0.0
    %316 = vmatprep.mubr.f32.mxu0 0.0
    %317 = vmatmul.mubr.f32.gmra.mxu0 %v151
    %v318 = vpop.f32.mrf.mxu0
    %v319 = vadd.f32 %v250, %v318
    %v320 = vpop.f32.mrf.mxu0
    %321 = vmatprep.mubr.f32.mxu0 0.0
    %322 = vmatmul.mubr.f32.gmra.mxu0 %v152
    %v323 = vpop.f32.mrf.mxu0
    %v324 = vadd.f32 %v250, %v323
    %v325 = vpop.f32.mrf.mxu0
    %326 = vdwg.mxu0
    %v327 = vxor.u32 %v319, 2147483648
    %v328 = vxor.u32 %v324, 2147483648
    %v329 = vmul.f32 %v327, 1.442695
    %v330 = vpow.pop %v329
    %v331 = vmul.f32 %v328, 1.442695
    %v332 = vpow.pop %v331
    %v333 = vadd.f32 %v330, 1.0
    %v334 = vadd.f32 %v332, 1.0
    %v335 = vrcp.pop %v333
    %v336 = vmul.f32 1.0, %v335
    %v337 = vrcp.pop %v334
    %v338 = vmul.f32 1.0, %v337
    %v339 = vmul.f32 %v243, %v149
    %v340 = vmul.f32 %v245, %v150
    %v341 = vmul.f32 %v336, %v151
    %v342 = vmul.f32 %v338, %v152
    %v343 = vadd.f32 %v339, %v341
    %v344 = vadd.f32 %v340, %v342
    %v346 = vlaneseq
    %v347 = vshrl.u32 %v346, 7
    %v348 = vsub.s32 0, %v347
    %v349 = vrot.slane %v148, %v348
    %351 = vmatprep.subr.mxu0 0.0
    %352 = vmatpush1.msra.mxu0 %v145
    %353 = vmatprep.subr.mxu0 0.0
    %354 = vmatpush1.msra.mxu0 %v144
    %355 = vmatprep.subr.mxu0 0.0
    %356 = vmatpush1.msra.mxu0 %v143
    %357 = vmatprep.subr.mxu0 0.0
    %358 = vmatpush1.msra.mxu0 %v142
    %359 = vmatprep.subr.mxu0 0.0
    %360 = vmatpush1.msra.mxu0 %v141
    %361 = vmatprep.subr.mxu0 0.0
    %362 = vmatpush1.msra.mxu0 %v140
    %363 = vmatprep.subr.mxu0 0.0
    %364 = vmatpush1.msra.mxu0 %v139
    %365 = vmatprep.subr.mxu0 0.0
    %366 = vmatpush1.msra.mxu0 %v138
    %367 = vmatprep.subr.mxu0 0.0
    %368 = vmatpush1.msra.mxu0 %v137
    %369 = vmatprep.subr.mxu0 0.0
    %370 = vmatpush1.msra.mxu0 %v136
    %371 = vmatprep.subr.mxu0 0.0
    %372 = vmatpush1.msra.mxu0 %v135
    %373 = vmatprep.subr.mxu0 0.0
    %374 = vmatpush1.msra.mxu0 %v134
    %375 = vmatprep.subr.mxu0 0.0
    %376 = vmatpush1.msra.mxu0 %v133
    %377 = vmatprep.subr.mxu0 0.0
    %378 = vmatpush1.msra.mxu0 %v132
    %379 = vmatprep.subr.mxu0 0.0
    %380 = vmatpush1.msra.mxu0 %v131
    %381 = vmatprep.subr.mxu0 0.0
    %382 = vmatpush1.msra.mxu0 %v130
    %383 = vmatprep.subr.mxu0 0.0
    %384 = vmatpush2.msra.mxu0 0.0
    %385 = vmatprep.subr.mxu0 0.0
    %386 = vmatpush2.msra.mxu0 0.0
    %387 = vmatprep.subr.mxu0 0.0
    %388 = vmatpush2.msra.mxu0 0.0
    %389 = vmatprep.subr.mxu0 0.0
    %390 = vmatpush2.msra.mxu0 0.0
    %391 = vmatprep.subr.mxu0 0.0
    %392 = vmatpush2.msra.mxu0 0.0
    %393 = vmatprep.subr.mxu0 0.0
    %394 = vmatpush2.msra.mxu0 0.0
    %395 = vmatprep.subr.mxu0 0.0
    %396 = vmatpush2.msra.mxu0 0.0
    %397 = vmatprep.subr.mxu0 0.0
    %398 = vmatpush2.msra.mxu0 0.0
    %399 = vmatprep.subr.mxu0 0.0
    %400 = vmatpush2.msra.mxu0 0.0
    %401 = vmatprep.subr.mxu0 0.0
    %402 = vmatpush2.msra.mxu0 0.0
    %403 = vmatprep.subr.mxu0 0.0
    %404 = vmatpush2.msra.mxu0 0.0
    %405 = vmatprep.subr.mxu0 0.0
    %406 = vmatpush2.msra.mxu0 0.0
    %407 = vmatprep.subr.mxu0 0.0
    %408 = vmatpush2.msra.mxu0 0.0
    %409 = vmatprep.subr.mxu0 0.0
    %410 = vmatpush2.msra.mxu0 0.0
    %411 = vmatprep.subr.mxu0 0.0
    %412 = vmatpush2.msra.mxu0 0.0
    %413 = vmatprep.subr.mxu0 0.0
    %414 = vmatpush2.msra.mxu0 0.0
    %415 = vmatprep.mubr.f32.mxu0 0.0
    %416 = vmatmul.mubr.f32.gmra.mxu0 %v343
    %v417 = vpop.f32.mrf.mxu0
    %v418 = vadd.f32 %v349, %v417
    %v419 = vpop.f32.mrf.mxu0
    %420 = vmatprep.mubr.f32.mxu0 0.0
    %421 = vmatmul.mubr.f32.gmra.mxu0 %v344
    %v422 = vpop.f32.mrf.mxu0
    %v423 = vadd.f32 %v349, %v422
    %v424 = vpop.f32.mrf.mxu0
    %425 = vdwg.mxu0
    %v426 = vxor.u32 %v418, 2147483648
    %v427 = vxor.u32 %v423, 2147483648
    %v428 = vmul.f32 %v426, 1.442695
    %v429 = vpow.pop %v428
    %v430 = vmul.f32 %v427, 1.442695
    %v431 = vpow.pop %v430
    %v432 = vadd.f32 %v429, 1.0
    %v433 = vadd.f32 %v431, 1.0
    %v434 = vrcp.pop %v432
    %v435 = vmul.f32 1.0, %v434
    %v436 = vrcp.pop %v433
    %v437 = vmul.f32 1.0, %v436
    %v438 = vtanh.pop %v343
    %v439 = vtanh.pop %v344
    %v440 = vmul.f32 %v435, %v438
    %v441 = vmul.f32 %v437, %v439
    %442 = vst [vmem:[#allocation11] sm:$0xff] %v440
    %443 = vst [vmem:[#allocation11 + $0x8] sm:$0xff] %v441
    %v444 = vld [vmem:[#allocation2 + $0x10] sm:$0xff]
    %v445 = vld [vmem:[#allocation2 + $0x18] sm:$0xff]
    %v446 = vld [vmem:[#allocation5 + $0x10] sm:$0xff]
    %v447 = vld [vmem:[#allocation5 + $0x18] sm:$0xff]
    %448 = vmatprep.subr.mxu0 0.0
    %449 = vmatpush1.msra.mxu0 %v113
    %450 = vmatprep.subr.mxu0 0.0
    %451 = vmatpush1.msra.mxu0 %v112
    %452 = vmatprep.subr.mxu0 0.0
    %453 = vmatpush1.msra.mxu0 %v111
    %454 = vmatprep.subr.mxu0 0.0
    %455 = vmatpush1.msra.mxu0 %v110
    %456 = vmatprep.subr.mxu0 0.0
    %457 = vmatpush1.msra.mxu0 %v109
    %458 = vmatprep.subr.mxu0 0.0
    %459 = vmatpush1.msra.mxu0 %v108
    %460 = vmatprep.subr.mxu0 0.0
    %461 = vmatpush1.msra.mxu0 %v107
    %462 = vmatprep.subr.mxu0 0.0
    %463 = vmatpush1.msra.mxu0 %v106
    %464 = vmatprep.subr.mxu0 0.0
    %465 = vmatpush1.msra.mxu0 %v105
    %466 = vmatprep.subr.mxu0 0.0
    %467 = vmatpush1.msra.mxu0 %v104
    %468 = vmatprep.subr.mxu0 0.0
    %469 = vmatpush1.msra.mxu0 %v103
    %470 = vmatprep.subr.mxu0 0.0
    %471 = vmatpush1.msra.mxu0 %v102
    %472 = vmatprep.subr.mxu0 0.0
    %473 = vmatpush1.msra.mxu0 %v101
    %474 = vmatprep.subr.mxu0 0.0
    %475 = vmatpush1.msra.mxu0 %v100
    %476 = vmatprep.subr.mxu0 0.0
    %477 = vmatpush1.msra.mxu0 %v99
    %478 = vmatprep.subr.mxu0 0.0
    %479 = vmatpush1.msra.mxu0 %v98
    %480 = vmatprep.subr.mxu0 0.0
    %481 = vmatpush2.msra.mxu0 0.0
    %482 = vmatprep.subr.mxu0 0.0
    %483 = vmatpush2.msra.mxu0 0.0
    %484 = vmatprep.subr.mxu0 0.0
    %485 = vmatpush2.msra.mxu0 0.0
    %486 = vmatprep.subr.mxu0 0.0
    %487 = vmatpush2.msra.mxu0 0.0
    %488 = vmatprep.subr.mxu0 0.0
    %489 = vmatpush2.msra.mxu0 0.0
    %490 = vmatprep.subr.mxu0 0.0
    %491 = vmatpush2.msra.mxu0 0.0
    %492 = vmatprep.subr.mxu0 0.0
    %493 = vmatpush2.msra.mxu0 0.0
    %494 = vmatprep.subr.mxu0 0.0
    %495 = vmatpush2.msra.mxu0 0.0
    %496 = vmatprep.subr.mxu0 0.0
    %497 = vmatpush2.msra.mxu0 0.0
    %498 = vmatprep.subr.mxu0 0.0
    %499 = vmatpush2.msra.mxu0 0.0
    %500 = vmatprep.subr.mxu0 0.0
    %501 = vmatpush2.msra.mxu0 0.0
    %502 = vmatprep.subr.mxu0 0.0
    %503 = vmatpush2.msra.mxu0 0.0
    %504 = vmatprep.subr.mxu0 0.0
    %505 = vmatpush2.msra.mxu0 0.0
    %506 = vmatprep.subr.mxu0 0.0
    %507 = vmatpush2.msra.mxu0 0.0
    %508 = vmatprep.subr.mxu0 0.0
    %509 = vmatpush2.msra.mxu0 0.0
    %510 = vmatprep.subr.mxu0 0.0
    %511 = vmatpush2.msra.mxu0 0.0
    %512 = vmatprep.mubr.f32.mxu0 0.0
    %513 = vmatmul.mubr.f32.gmra.mxu0 %v444
    %v514 = vpop.f32.mrf.mxu0
    %v515 = vadd.f32 %v157, %v514
    %v516 = vpop.f32.mrf.mxu0
    %517 = vmatprep.mubr.f32.mxu0 0.0
    %518 = vmatmul.mubr.f32.gmra.mxu0 %v445
    %v519 = vpop.f32.mrf.mxu0
    %v520 = vadd.f32 %v157, %v519
    %v521 = vpop.f32.mrf.mxu0
    %522 = vdwg.mxu0
    %v523 = vxor.u32 %v515, 2147483648
    %v524 = vxor.u32 %v520, 2147483648
    %v525 = vmul.f32 %v523, 1.442695
    %v526 = vpow.pop %v525
    %v527 = vmul.f32 %v524, 1.442695
    %v528 = vpow.pop %v527
    %v529 = vadd.f32 %v526, 1.0
    %v530 = vadd.f32 %v528, 1.0
    %v531 = vrcp.pop %v529
    %v532 = vmul.f32 1.0, %v531
    %v533 = vrcp.pop %v530
    %v534 = vmul.f32 1.0, %v533
    %535 = vmatprep.subr.mxu0 0.0
    %536 = vmatpush1.msra.mxu0 %v129
    %537 = vmatprep.subr.mxu0 0.0
    %538 = vmatpush1.msra.mxu0 %v128
    %539 = vmatprep.subr.mxu0 0.0
    %540 = vmatpush1.msra.mxu0 %v127
    %541 = vmatprep.subr.mxu0 0.0
    %542 = vmatpush1.msra.mxu0 %v126
    %543 = vmatprep.subr.mxu0 0.0
    %544 = vmatpush1.msra.mxu0 %v125
    %545 = vmatprep.subr.mxu0 0.0
    %546 = vmatpush1.msra.mxu0 %v124
    %547 = vmatprep.subr.mxu0 0.0
    %548 = vmatpush1.msra.mxu0 %v123
    %549 = vmatprep.subr.mxu0 0.0
    %550 = vmatpush1.msra.mxu0 %v122
    %551 = vmatprep.subr.mxu0 0.0
    %552 = vmatpush1.msra.mxu0 %v121
    %553 = vmatprep.subr.mxu0 0.0
    %554 = vmatpush1.msra.mxu0 %v120
    %555 = vmatprep.subr.mxu0 0.0
    %556 = vmatpush1.msra.mxu0 %v119
    %557 = vmatprep.subr.mxu0 0.0
    %558 = vmatpush1.msra.mxu0 %v118
    %559 = vmatprep.subr.mxu0 0.0
    %560 = vmatpush1.msra.mxu0 %v117
    %561 = vmatprep.subr.mxu0 0.0
    %562 = vmatpush1.msra.mxu0 %v116
    %563 = vmatprep.subr.mxu0 0.0
    %564 = vmatpush1.msra.mxu0 %v115
    %565 = vmatprep.subr.mxu0 0.0
    %566 = vmatpush1.msra.mxu0 %v114
    %567 = vmatprep.subr.mxu0 0.0
    %568 = vmatpush2.msra.mxu0 0.0
    %569 = vmatprep.subr.mxu0 0.0
    %570 = vmatpush2.msra.mxu0 0.0
    %571 = vmatprep.subr.mxu0 0.0
    %572 = vmatpush2.msra.mxu0 0.0
    %573 = vmatprep.subr.mxu0 0.0
    %574 = vmatpush2.msra.mxu0 0.0
    %575 = vmatprep.subr.mxu0 0.0
    %576 = vmatpush2.msra.mxu0 0.0
    %577 = vmatprep.subr.mxu0 0.0
    %578 = vmatpush2.msra.mxu0 0.0
    %579 = vmatprep.subr.mxu0 0.0
    %580 = vmatpush2.msra.mxu0 0.0
    %581 = vmatprep.subr.mxu0 0.0
    %582 = vmatpush2.msra.mxu0 0.0
    %583 = vmatprep.subr.mxu0 0.0
    %584 = vmatpush2.msra.mxu0 0.0
    %585 = vmatprep.subr.mxu0 0.0
    %586 = vmatpush2.msra.mxu0 0.0
    %587 = vmatprep.subr.mxu0 0.0
    %588 = vmatpush2.msra.mxu0 0.0
    %589 = vmatprep.subr.mxu0 0.0
    %590 = vmatpush2.msra.mxu0 0.0
    %591 = vmatprep.subr.mxu0 0.0
    %592 = vmatpush2.msra.mxu0 0.0
    %593 = vmatprep.subr.mxu0 0.0
    %594 = vmatpush2.msra.mxu0 0.0
    %595 = vmatprep.subr.mxu0 0.0
    %596 = vmatpush2.msra.mxu0 0.0
    %597 = vmatprep.subr.mxu0 0.0
    %598 = vmatpush2.msra.mxu0 0.0
    %599 = vmatprep.mubr.f32.mxu0 0.0
    %600 = vmatmul.mubr.f32.gmra.mxu0 %v446
    %v601 = vpop.f32.mrf.mxu0
    %v602 = vadd.f32 %v250, %v601
    %v603 = vpop.f32.mrf.mxu0
    %604 = vmatprep.mubr.f32.mxu0 0.0
    %605 = vmatmul.mubr.f32.gmra.mxu0 %v447
    %v606 = vpop.f32.mrf.mxu0
    %v607 = vadd.f32 %v250, %v606
    %v608 = vpop.f32.mrf.mxu0
    %609 = vdwg.mxu0
    %v610 = vxor.u32 %v602, 2147483648
    %v611 = vxor.u32 %v607, 2147483648
    %v612 = vmul.f32 %v610, 1.442695
    %v613 = vpow.pop %v612
    %v614 = vmul.f32 %v611, 1.442695
    %v615 = vpow.pop %v614
    %v616 = vadd.f32 %v613, 1.0
    %v617 = vadd.f32 %v615, 1.0
    %v618 = vrcp.pop %v616
    %v619 = vmul.f32 1.0, %v618
    %v620 = vrcp.pop %v617
    %v621 = vmul.f32 1.0, %v620
    %v622 = vmul.f32 %v532, %v444
    %v623 = vmul.f32 %v534, %v445
    %v624 = vmul.f32 %v619, %v446
    %v625 = vmul.f32 %v621, %v447
    %v626 = vadd.f32 %v622, %v624
    %v627 = vadd.f32 %v623, %v625
    %628 = vmatprep.subr.mxu0 0.0
    %629 = vmatpush1.msra.mxu0 %v145
    %630 = vmatprep.subr.mxu0 0.0
    %631 = vmatpush1.msra.mxu0 %v144
    %632 = vmatprep.subr.mxu0 0.0
    %633 = vmatpush1.msra.mxu0 %v143
    %634 = vmatprep.subr.mxu0 0.0
    %635 = vmatpush1.msra.mxu0 %v142
    %636 = vmatprep.subr.mxu0 0.0
    %637 = vmatpush1.msra.mxu0 %v141
    %638 = vmatprep.subr.mxu0 0.0
    %639 = vmatpush1.msra.mxu0 %v140
    %640 = vmatprep.subr.mxu0 0.0
    %641 = vmatpush1.msra.mxu0 %v139
    %642 = vmatprep.subr.mxu0 0.0
    %643 = vmatpush1.msra.mxu0 %v138
    %644 = vmatprep.subr.mxu0 0.0
    %645 = vmatpush1.msra.mxu0 %v137
    %646 = vmatprep.subr.mxu0 0.0
    %647 = vmatpush1.msra.mxu0 %v136
    %648 = vmatprep.subr.mxu0 0.0
    %649 = vmatpush1.msra.mxu0 %v135
    %650 = vmatprep.subr.mxu0 0.0
    %651 = vmatpush1.msra.mxu0 %v134
    %652 = vmatprep.subr.mxu0 0.0
    %653 = vmatpush1.msra.mxu0 %v133
    %654 = vmatprep.subr.mxu0 0.0
    %655 = vmatpush1.msra.mxu0 %v132
    %656 = vmatprep.subr.mxu0 0.0
    %657 = vmatpush1.msra.mxu0 %v131
    %658 = vmatprep.subr.mxu0 0.0
    %659 = vmatpush1.msra.mxu0 %v130
    %660 = vmatprep.subr.mxu0 0.0
    %661 = vmatpush2.msra.mxu0 0.0
    %662 = vmatprep.subr.mxu0 0.0
    %663 = vmatpush2.msra.mxu0 0.0
    %664 = vmatprep.subr.mxu0 0.0
    %665 = vmatpush2.msra.mxu0 0.0
    %666 = vmatprep.subr.mxu0 0.0
    %667 = vmatpush2.msra.mxu0 0.0
    %668 = vmatprep.subr.mxu0 0.0
    %669 = vmatpush2.msra.mxu0 0.0
    %670 = vmatprep.subr.mxu0 0.0
    %671 = vmatpush2.msra.mxu0 0.0
    %672 = vmatprep.subr.mxu0 0.0
    %673 = vmatpush2.msra.mxu0 0.0
    %674 = vmatprep.subr.mxu0 0.0
    %675 = vmatpush2.msra.mxu0 0.0
    %676 = vmatprep.subr.mxu0 0.0
    %677 = vmatpush2.msra.mxu0 0.0
    %678 = vmatprep.subr.mxu0 0.0
    %679 = vmatpush2.msra.mxu0 0.0
    %680 = vmatprep.subr.mxu0 0.0
    %681 = vmatpush2.msra.mxu0 0.0
    %682 = vmatprep.subr.mxu0 0.0
    %683 = vmatpush2.msra.mxu0 0.0
    %684 = vmatprep.subr.mxu0 0.0
    %685 = vmatpush2.msra.mxu0 0.0
    %686 = vmatprep.subr.mxu0 0.0
    %687 = vmatpush2.msra.mxu0 0.0
    %688 = vmatprep.subr.mxu0 0.0
    %689 = vmatpush2.msra.mxu0 0.0
    %690 = vmatprep.subr.mxu0 0.0
    %691 = vmatpush2.msra.mxu0 0.0
    %692 = vmatprep.mubr.f32.mxu0 0.0
    %693 = vmatmul.mubr.f32.gmra.mxu0 %v626
    %v694 = vpop.f32.mrf.mxu0
    %v695 = vadd.f32 %v349, %v694
    %v696 = vpop.f32.mrf.mxu0
    %697 = vmatprep.mubr.f32.mxu0 0.0
    %698 = vmatmul.mubr.f32.gmra.mxu0 %v627
    %v699 = vpop.f32.mrf.mxu0
    %v700 = vadd.f32 %v349, %v699
    %v701 = vpop.f32.mrf.mxu0
    %702 = vdwg.mxu0
    %v703 = vxor.u32 %v695, 2147483648
    %v704 = vxor.u32 %v700, 2147483648
    %v705 = vmul.f32 %v703, 1.442695
    %v706 = vpow.pop %v705
    %v707 = vmul.f32 %v704, 1.442695
    %v708 = vpow.pop %v707
    %v709 = vadd.f32 %v706, 1.0
    %v710 = vadd.f32 %v708, 1.0
    %v711 = vrcp.pop %v709
    %v712 = vmul.f32 1.0, %v711
    %v713 = vrcp.pop %v710
    %v714 = vmul.f32 1.0, %v713
    %v715 = vtanh.pop %v626
    %v716 = vtanh.pop %v627
    %v717 = vmul.f32 %v712, %v715
    %v718 = vmul.f32 %v714, %v716
    %719 = vst [vmem:[#allocation11 + $0x10] sm:$0xff] %v717
    %720 = vst [vmem:[#allocation11 + $0x18] sm:$0xff] %v718
    // Predicated region
    $region54: #{gated_combination.1} parent=1 // pred_check
      _
    $region55: #{gated_combination.1} parent=1 // pred_check_branch
      %722 = sbr.rel (0) target = $region57
    $region56: #{gated_combination.1} parent=1 // pred_region
      %s724 = ssub.s32 512, 512
      %725 = vsyncadd [#allocation4], %s724
      %s726 = sshll.u32 [#allocation11], 4
      %s727 = int_to_ptr.vmem [resolvable:$true] %s726
      %732 = dma.vmem_to_hbm [thread:$0]  %s727, 512, %s8, [#allocation4], 128, 128, 8
    $region57: #{gated_combination.1} parent=1 // pred_fallthru
      _
    // Predicated region
    $region58: #{gated_combination.1} parent=1 // pred_check
      _
    $region59: #{gated_combination.1} parent=1 // pred_check_branch
      %734 = sbr.rel (0) target = $region61
    $region60: #{gated_combination.1} parent=1 // pred_region
      %735 = dma.done [#allocation4], 512
    $region61: #{gated_combination.1} parent=1 // pred_fallthru
      _
    %736 = vsyncpa [#allocation3], 1
    %737 = vsyncpa [#allocation6], 1
    %738 = vsyncpa [#allocation9], 1
    %739 = vsyncpa [#allocation4], 1

</llo_original>
